<compile_context>
chip_gen: v7x
topology: tpu7x:2x2x1
jax: 0.10.0
libtpu: 0.0.40
codegen_flags: <defaults>
</compile_context>

<pallas_src>
import numpy as np
import jax
import jax.numpy as jnp
from jax.experimental import pallas as pl
from jax.experimental.pallas import tpu as pltpu


# ----------------------------------------------------------------------------- kernel
def _mixupsample_kernel(x_ref,      # (T, H, W)        tile of input planes (B*C fused)
                        rcat_ref,   # (2Ho, H)         [mixing*Rb ; (1-mixing)*Rn]
                        cbt_ref,    # (W, Wo)          bilinear column operator, transposed
                        cnt_ref,    # (W, Wo)          nearest  column operator, transposed
                        o_ref,      # (T*Ho, Wo)       output slab for this tile
                        hb_ref,     # (T*Ho, W) f32    scratch: bilinear H-pass, all planes
                        hn_ref):    # (T*Ho, W) f32    scratch: nearest  H-pass, all planes
    T = x_ref.shape[0]
    Ho = rcat_ref.shape[0] // 2
    rcat = rcat_ref[...]

    # Stage 1 (H-pass): per-plane left-multiply by the branch-stacked row operator.
    # T is small and static, so this unrolls into T independent MXU matmuls of shape
    # (2Ho, H) x (H, W) that the scheduler pipelines back-to-back.  The two branch
    # halves are written into two sublane-dense staging buffers covering the whole tile.
    for t in range(T):  # static unroll over the (small) BC tile
        hs = jnp.dot(rcat, x_ref[t], preferred_element_type=jnp.float32)  # (2Ho, W)
        hb_ref[t * Ho:(t + 1) * Ho, :] = hs[:Ho, :]
        hn_ref[t * Ho:(t + 1) * Ho, :] = hs[Ho:, :]

    # Stage 2 (W-pass): folded over the whole tile -> M = T*Ho fills the MXU; the
    # branch mix (the weights were folded into rcat) reduces to a single VPU add.
    out = (jnp.dot(hb_ref[...], cbt_ref[...], preferred_element_type=jnp.float32)
           + jnp.dot(hn_ref[...], cnt_ref[...], preferred_element_type=jnp.float32))

    o_ref[...] = out.astype(o_ref.dtype)


# ----------------------------------------------------------------------------- operators
def _bilinear_matrix(n_in, n_out, scale):
    """1-D interpolation matrix matching F.interpolate(mode='bilinear', align_corners=False)."""
    o = np.arange(n_out, dtype=np.float64)
    src = (o + 0.5) / scale - 0.5          # half-pixel-center source coordinates
    src = np.maximum(src, 0.0)             # PyTorch clamps negative coordinates to 0
    i0 = np.minimum(np.floor(src).astype(np.int64), n_in - 1)
    i1 = np.minimum(i0 + 1, n_in - 1)
    w1 = src - i0
    m = np.zeros((n_out, n_in), np.float64)
    m[np.arange(n_out), i0] += 1.0 - w1
    m[np.arange(n_out), i1] += w1
    return m


def _nearest_matrix(n_in, n_out, scale):
    """1-D interpolation matrix matching F.interpolate(mode='nearest') for integer scale."""
    o = np.arange(n_out)
    src = np.minimum(np.floor(o / scale).astype(np.int64), n_in - 1)
    m = np.zeros((n_out, n_in), np.float64)
    m[np.arange(n_out), src] = 1.0
    return m


# ----------------------------------------------------------------------------- tiling
def _pick_bc_tile(BC, H, W, Ho, Wo, itemsize,
                  budget_bytes=8 * 2 ** 20, max_tile=64):
    """Largest divisor of BC whose per-step VMEM footprint fits the budget.

    budget_bytes is the per-generation knob: comfortably inside the 32 MiB default
    scoped VMEM on v6e/v7x (64 MiB physical on v7x) and well under v5e's 128 MiB.
    """
    # double-buffered in/out blocks + single-buffered f32 staging scratch, per plane
    per_plane = 2 * (H * W + Ho * Wo) * itemsize + 2 * Ho * W * 4
    cap = max(1, budget_bytes // per_plane)
    cap = int(min(cap, max_tile, BC))
    if BC > 1:
        # keep at least 2 grid steps so input DMA / compute / output writeback overlap
        cap = min(cap, max(1, BC // 2))
    for t in range(cap, 0, -1):
        if BC % t == 0:
            return t
    return 1


# ----------------------------------------------------------------------------- wrapper
def mix_upsample(x, mixing, scale_factor=2):
    """Pallas implementation of MixUpSample.forward. x: (B, C, H, W)."""
    # TODO(synk): nearest operator matches PyTorch only for integer scale factors
    # (floor(o/scale)); fractional scales would need floor(o*H/Ho) semantics.
    assert isinstance(scale_factor, int) and scale_factor >= 1
    B, C, H, W = x.shape
    Ho, Wo = H * scale_factor, W * scale_factor
    BC = B * C
    dtype = x.dtype

    # Small 1-D operators (built once on host, mixing folded in on device).
    rb = jnp.asarray(_bilinear_matrix(H, Ho, scale_factor), jnp.float32)
    rn = jnp.asarray(_nearest_matrix(H, Ho, scale_factor), jnp.float32)
    cbt = jnp.asarray(_bilinear_matrix(W, Wo, scale_factor).T, jnp.float32)
    cnt = jnp.asarray(_nearest_matrix(W, Wo, scale_factor).T, jnp.float32)

    m = jnp.asarray(mixing, jnp.float32)
    rcat = jnp.concatenate([m * rb, (1.0 - m) * rn], axis=0).astype(dtype)  # (2Ho, H)
    cbt = cbt.astype(dtype)
    cnt = cnt.astype(dtype)

    x3 = x.reshape(BC, H, W)            # free metadata reshape; model dtype preserved

    T = _pick_bc_tile(BC, H, W, Ho, Wo, x.dtype.itemsize)
    grid = (BC // T,)

    out2 = pl.pallas_call(
        _mixupsample_kernel,
        out_shape=jax.ShapeDtypeStruct((BC * Ho, Wo), dtype),
        grid=grid,
        in_specs=[
            # pipelined tile of T planes
            pl.BlockSpec((T, H, W), lambda i: (i, 0, 0)),
            # loop-invariant operators: full-array blocks, constant index_map
            pl.BlockSpec((2 * Ho, H), lambda i: (0, 0)),
            pl.BlockSpec((W, Wo), lambda i: (0, 0)),
            pl.BlockSpec((W, Wo), lambda i: (0, 0)),
        ],
        # contiguous (T*Ho, Wo) output slab per step; lane-dense whenever Wo >= 128
        out_specs=pl.BlockSpec((T * Ho, Wo), lambda i: (i, 0)),
        scratch_shapes=[
            pltpu.VMEM((T * Ho, W), jnp.float32),   # bilinear H-pass staging
            pltpu.VMEM((T * Ho, W), jnp.float32),   # nearest  H-pass staging
        ],
        compiler_params=pltpu.CompilerParams(
            # independent planes -> shard BC tiles across v7x's 2 TensorCores
            dimension_semantics=("parallel",),
            # explicit scoped-VMEM budget: above v5e's 16 MiB default, within v7x headroom
            vmem_limit_bytes=32 * 1024 * 1024,
        ),
    )(x3, rcat, cbt, cnt)

    return out2.reshape(B, C, Ho, Wo)   # free metadata reshape


# ----------------------------------------------------------------------------- reference
def _reference_mixupsample(x, mixing, scale):
    """Gather-based JAX reference of MixUpSample.forward (PyTorch semantics)."""
    def axis_interp(n_in, n_out):
        src = (jnp.arange(n_out, dtype=jnp.float32) + 0.5) / scale - 0.5
        src = jnp.maximum(src, 0.0)
        i0 = jnp.minimum(jnp.floor(src).astype(jnp.int32), n_in - 1)
        i1 = jnp.minimum(i0 + 1, n_in - 1)
        w1 = src - i0.astype(jnp.float32)
        return i0, i1, w1

    B, C, H, W = x.shape
    r0, r1, wr = axis_interp(H, H * scale)
    c0, c1, wc = axis_interp(W, W * scale)
    top = (jnp.take(x, r0, axis=2) * (1.0 - wr)[None, None, :, None]
           + jnp.take(x, r1, axis=2) * wr[None, None, :, None])
    bil = (jnp.take(top, c0, axis=3) * (1.0 - wc)[None, None, None, :]
           + jnp.take(top, c1, axis=3) * wc[None, None, None, :])
    nn = jnp.repeat(jnp.repeat(x, scale, axis=2), scale, axis=3)  # nearest @ integer scale
    return mixing * bil + (1.0 - mixing) * nn


# ----------------------------------------------------------------------------- main
if __name__ == "__main__":
    B, C, H, W = 2, 4, 16, 16
    scale = 2

    key = jax.random.PRNGKey(0)
    x = jax.random.normal(key, (B, C, H, W), jnp.float32)
    mixing = jnp.float32(0.5)   # nn.Parameter(torch.tensor(0.5)) initial value

    out = mix_upsample(x, mixing, scale_factor=scale)
    out = jax.block_until_ready(out)

    ref = jax.block_until_ready(_reference_mixupsample(x, mixing, scale))

    assert out.shape == (B, C, H * scale, W * scale)
    assert np.allclose(np.asarray(out), np.asarray(ref), atol=1e-3, rtol=1e-3), (
        "Pallas kernel mismatch vs JAX reference")

    print("KERNEL_OK")
</pallas_src>

<mosaic_0001>
module attributes {stable_mosaic.version = 11 : i64} {
  func.func @_mixupsample_kernel(%arg0: i32, %arg1: memref<4x16x16xf32, #tpu.memory_space<vmem>>, %arg2: memref<64x16xf32, #tpu.memory_space<vmem>>, %arg3: memref<16x32xf32, #tpu.memory_space<vmem>>, %arg4: memref<16x32xf32, #tpu.memory_space<vmem>>, %arg5: memref<128x32xf32, #tpu.memory_space<vmem>>, %arg6: memref<128x16xf32, #tpu.memory_space<vmem>>, %arg7: memref<128x16xf32, #tpu.memory_space<vmem>>) attributes {dimension_semantics = [#tpu.dimension_semantics<parallel>], iteration_bounds = array<i64: 2>, scalar_prefetch = 0 : i64, scratch_operands = 2 : i64, tpu.core_type = #tpu.core_type<tc>, window_params = [{transform_indices = @transform_0, window_bounds = array<i64: 4, 16, 16>}, {pipeline_mode = #tpu.pipeline_mode<synchronous>, transform_indices = @transform_1, window_bounds = array<i64: 64, 16>}, {pipeline_mode = #tpu.pipeline_mode<synchronous>, transform_indices = @transform_2, window_bounds = array<i64: 16, 32>}, {pipeline_mode = #tpu.pipeline_mode<synchronous>, transform_indices = @transform_3, window_bounds = array<i64: 16, 32>}, {transform_indices = @transform_4, window_bounds = array<i64: 128, 32>}]} {
    %c0 = arith.constant 0 : index
    %c0_0 = arith.constant 0 : index
    %0 = vector.load %arg2[%c0, %c0_0] : memref<64x16xf32, #tpu.memory_space<vmem>>, vector<64x16xf32>
    %c0_1 = arith.constant 0 : index
    %c0_2 = arith.constant 0 : index
    %c0_3 = arith.constant 0 : index
    %1 = vector.load %arg1[%c0_1, %c0_2, %c0_3] : memref<4x16x16xf32, #tpu.memory_space<vmem>>, vector<1x16x16xf32>
    %2 = vector.shape_cast %1 : vector<1x16x16xf32> to vector<16x16xf32>
    %cst = arith.constant dense<0.000000e+00> : vector<64x16xf32>
    %3 = tpu.matmul %0, %2, %cst {dimension_numbers = #tpu.dot_dimension_numbers<[1], [0], [0], [1], [0, 0, 1, 1], [], []>} : vector<64x16xf32>, vector<16x16xf32>, vector<64x16xf32> -> vector<64x16xf32>
    %4 = vector.extract_strided_slice %3 {offsets = [0, 0], sizes = [32, 16], strides = [1, 1]} : vector<64x16xf32> to vector<32x16xf32>
    %c0_4 = arith.constant 0 : index
    %c0_5 = arith.constant 0 : index
    %5 = vector.load %arg6[%c0_4, %c0_5] : memref<128x16xf32, #tpu.memory_space<vmem>>, vector<32x16xf32>
    tpu.vector_store %arg6[%c0_4, %c0_5], %4 {strides = array<i32>} : memref<128x16xf32, #tpu.memory_space<vmem>>, vector<32x16xf32>,
    %6 = vector.extract_strided_slice %3 {offsets = [32, 0], sizes = [32, 16], strides = [1, 1]} : vector<64x16xf32> to vector<32x16xf32>
    %c0_6 = arith.constant 0 : index
    %c0_7 = arith.constant 0 : index
    %7 = vector.load %arg7[%c0_6, %c0_7] : memref<128x16xf32, #tpu.memory_space<vmem>>, vector<32x16xf32>
    tpu.vector_store %arg7[%c0_6, %c0_7], %6 {strides = array<i32>} : memref<128x16xf32, #tpu.memory_space<vmem>>, vector<32x16xf32>,
    %c1 = arith.constant 1 : index
    %c0_8 = arith.constant 0 : index
    %c0_9 = arith.constant 0 : index
    %8 = vector.load %arg1[%c1, %c0_8, %c0_9] : memref<4x16x16xf32, #tpu.memory_space<vmem>>, vector<1x16x16xf32>
    %9 = vector.shape_cast %8 : vector<1x16x16xf32> to vector<16x16xf32>
    %cst_10 = arith.constant dense<0.000000e+00> : vector<64x16xf32>
    %10 = tpu.matmul %0, %9, %cst_10 {dimension_numbers = #tpu.dot_dimension_numbers<[1], [0], [0], [1], [0, 0, 1, 1], [], []>} : vector<64x16xf32>, vector<16x16xf32>, vector<64x16xf32> -> vector<64x16xf32>
    %11 = vector.extract_strided_slice %10 {offsets = [0, 0], sizes = [32, 16], strides = [1, 1]} : vector<64x16xf32> to vector<32x16xf32>
    %c32 = arith.constant 32 : index
    %c0_11 = arith.constant 0 : index
    %12 = vector.load %arg6[%c32, %c0_11] : memref<128x16xf32, #tpu.memory_space<vmem>>, vector<32x16xf32>
    tpu.vector_store %arg6[%c32, %c0_11], %11 {strides = array<i32>} : memref<128x16xf32, #tpu.memory_space<vmem>>, vector<32x16xf32>,
    %13 = vector.extract_strided_slice %10 {offsets = [32, 0], sizes = [32, 16], strides = [1, 1]} : vector<64x16xf32> to vector<32x16xf32>
    %c32_12 = arith.constant 32 : index
    %c0_13 = arith.constant 0 : index
    %14 = vector.load %arg7[%c32_12, %c0_13] : memref<128x16xf32, #tpu.memory_space<vmem>>, vector<32x16xf32>
    tpu.vector_store %arg7[%c32_12, %c0_13], %13 {strides = array<i32>} : memref<128x16xf32, #tpu.memory_space<vmem>>, vector<32x16xf32>,
    %c2 = arith.constant 2 : index
    %c0_14 = arith.constant 0 : index
    %c0_15 = arith.constant 0 : index
    %15 = vector.load %arg1[%c2, %c0_14, %c0_15] : memref<4x16x16xf32, #tpu.memory_space<vmem>>, vector<1x16x16xf32>
    %16 = vector.shape_cast %15 : vector<1x16x16xf32> to vector<16x16xf32>
    %cst_16 = arith.constant dense<0.000000e+00> : vector<64x16xf32>
    %17 = tpu.matmul %0, %16, %cst_16 {dimension_numbers = #tpu.dot_dimension_numbers<[1], [0], [0], [1], [0, 0, 1, 1], [], []>} : vector<64x16xf32>, vector<16x16xf32>, vector<64x16xf32> -> vector<64x16xf32>
    %18 = vector.extract_strided_slice %17 {offsets = [0, 0], sizes = [32, 16], strides = [1, 1]} : vector<64x16xf32> to vector<32x16xf32>
    %c64 = arith.constant 64 : index
    %c0_17 = arith.constant 0 : index
    %19 = vector.load %arg6[%c64, %c0_17] : memref<128x16xf32, #tpu.memory_space<vmem>>, vector<32x16xf32>
    tpu.vector_store %arg6[%c64, %c0_17], %18 {strides = array<i32>} : memref<128x16xf32, #tpu.memory_space<vmem>>, vector<32x16xf32>,
    %20 = vector.extract_strided_slice %17 {offsets = [32, 0], sizes = [32, 16], strides = [1, 1]} : vector<64x16xf32> to vector<32x16xf32>
    %c64_18 = arith.constant 64 : index
    %c0_19 = arith.constant 0 : index
    %21 = vector.load %arg7[%c64_18, %c0_19] : memref<128x16xf32, #tpu.memory_space<vmem>>, vector<32x16xf32>
    tpu.vector_store %arg7[%c64_18, %c0_19], %20 {strides = array<i32>} : memref<128x16xf32, #tpu.memory_space<vmem>>, vector<32x16xf32>,
    %c3 = arith.constant 3 : index
    %c0_20 = arith.constant 0 : index
    %c0_21 = arith.constant 0 : index
    %22 = vector.load %arg1[%c3, %c0_20, %c0_21] : memref<4x16x16xf32, #tpu.memory_space<vmem>>, vector<1x16x16xf32>
    %23 = vector.shape_cast %22 : vector<1x16x16xf32> to vector<16x16xf32>
    %cst_22 = arith.constant dense<0.000000e+00> : vector<64x16xf32>
    %24 = tpu.matmul %0, %23, %cst_22 {dimension_numbers = #tpu.dot_dimension_numbers<[1], [0], [0], [1], [0, 0, 1, 1], [], []>} : vector<64x16xf32>, vector<16x16xf32>, vector<64x16xf32> -> vector<64x16xf32>
    %25 = vector.extract_strided_slice %24 {offsets = [0, 0], sizes = [32, 16], strides = [1, 1]} : vector<64x16xf32> to vector<32x16xf32>
    %c96 = arith.constant 96 : index
    %c0_23 = arith.constant 0 : index
    %26 = vector.load %arg6[%c96, %c0_23] : memref<128x16xf32, #tpu.memory_space<vmem>>, vector<32x16xf32>
    tpu.vector_store %arg6[%c96, %c0_23], %25 {strides = array<i32>} : memref<128x16xf32, #tpu.memory_space<vmem>>, vector<32x16xf32>,
    %27 = vector.extract_strided_slice %24 {offsets = [32, 0], sizes = [32, 16], strides = [1, 1]} : vector<64x16xf32> to vector<32x16xf32>
    %c96_24 = arith.constant 96 : index
    %c0_25 = arith.constant 0 : index
    %28 = vector.load %arg7[%c96_24, %c0_25] : memref<128x16xf32, #tpu.memory_space<vmem>>, vector<32x16xf32>
    tpu.vector_store %arg7[%c96_24, %c0_25], %27 {strides = array<i32>} : memref<128x16xf32, #tpu.memory_space<vmem>>, vector<32x16xf32>,
    %c0_26 = arith.constant 0 : index
    %c0_27 = arith.constant 0 : index
    %29 = vector.load %arg6[%c0_26, %c0_27] : memref<128x16xf32, #tpu.memory_space<vmem>>, vector<128x16xf32>
    %c0_28 = arith.constant 0 : index
    %c0_29 = arith.constant 0 : index
    %30 = vector.load %arg3[%c0_28, %c0_29] : memref<16x32xf32, #tpu.memory_space<vmem>>, vector<16x32xf32>
    %cst_30 = arith.constant dense<0.000000e+00> : vector<128x32xf32>
    %31 = tpu.matmul %29, %30, %cst_30 {dimension_numbers = #tpu.dot_dimension_numbers<[1], [0], [0], [1], [0, 0, 1, 1], [], []>} : vector<128x16xf32>, vector<16x32xf32>, vector<128x32xf32> -> vector<128x32xf32>
    %c0_31 = arith.constant 0 : index
    %c0_32 = arith.constant 0 : index
    %32 = vector.load %arg7[%c0_31, %c0_32] : memref<128x16xf32, #tpu.memory_space<vmem>>, vector<128x16xf32>
    %c0_33 = arith.constant 0 : index
    %c0_34 = arith.constant 0 : index
    %33 = vector.load %arg4[%c0_33, %c0_34] : memref<16x32xf32, #tpu.memory_space<vmem>>, vector<16x32xf32>
    %cst_35 = arith.constant dense<0.000000e+00> : vector<128x32xf32>
    %34 = tpu.matmul %32, %33, %cst_35 {dimension_numbers = #tpu.dot_dimension_numbers<[1], [0], [0], [1], [0, 0, 1, 1], [], []>} : vector<128x16xf32>, vector<16x32xf32>, vector<128x32xf32> -> vector<128x32xf32>
    %35 = arith.addf %31, %34 : vector<128x32xf32>
    %c0_36 = arith.constant 0 : index
    %c0_37 = arith.constant 0 : index
    %36 = vector.load %arg5[%c0_36, %c0_37] : memref<128x32xf32, #tpu.memory_space<vmem>>, vector<128x32xf32>
    tpu.vector_store %arg5[%c0_36, %c0_37], %35 {strides = array<i32>} : memref<128x32xf32, #tpu.memory_space<vmem>>, vector<128x32xf32>,
    return
  }
  func.func @transform_0(%arg0: i32) -> (i32, i32, i32) {
    %c0_i32 = arith.constant 0 : i32
    %c0_i32_0 = arith.constant 0 : i32
    %c0_i32_1 = arith.constant 0 : i32
    return %arg0, %c0_i32, %c0_i32_0 : i32, i32, i32
  }
  func.func @transform_1(%arg0: i32) -> (i32, i32) {
    %c0_i32 = arith.constant 0 : i32
    %c0_i32_0 = arith.constant 0 : i32
    %c0_i32_1 = arith.constant 0 : i32
    return %c0_i32, %c0_i32_0 : i32, i32
  }
  func.func @transform_2(%arg0: i32) -> (i32, i32) {
    %c0_i32 = arith.constant 0 : i32
    %c0_i32_0 = arith.constant 0 : i32
    %c0_i32_1 = arith.constant 0 : i32
    return %c0_i32, %c0_i32_0 : i32, i32
  }
  func.func @transform_3(%arg0: i32) -> (i32, i32) {
    %c0_i32 = arith.constant 0 : i32
    %c0_i32_0 = arith.constant 0 : i32
    %c0_i32_1 = arith.constant 0 : i32
    return %c0_i32, %c0_i32_0 : i32, i32
  }
  func.func @transform_4(%arg0: i32) -> (i32, i32) {
    %c0_i32 = arith.constant 0 : i32
    %c0_i32_0 = arith.constant 0 : i32
    return %arg0, %c0_i32 : i32, i32
  }
}

</mosaic_0001>

<llo_original>
// kernel: tpu_custom_call.1
$region0: #{tpu_custom_call.1}
  #allocation0 [shape = 'u32[]', space=smem, size = 0x4, offset = 0x4, fixed_abs, tag = 'smem constant byte address 0x4 - core index']
  #allocation1 [shape = 'u32[144,128]{1,0:T(1,128)}', space=vmem, size = 0x12000, scoped, tag = 'internal scratch']
  #allocation2 [shape = 'f32[128,16]{1,0:T(8,128)}', space=vmem, size = 0x10000, scoped, tag = 'scratch operand']
  #allocation3 [shape = 'f32[128,16]{1,0:T(8,128)}', space=vmem, size = 0x10000, scoped, tag = 'scratch operand']
  %s0 = inlined_call_operand.hbm [shape: f32[8,16,16], index: 0, kind: input, shape index: {}]
  %s1 = inlined_call_operand.vmem [shape: f32[64,16], index: 1, kind: input, shape index: {}]
  %s2 = inlined_call_operand.vmem [shape: f32[16,32], index: 2, kind: input, shape index: {}]
  %s3 = inlined_call_operand.vmem [shape: f32[16,32], index: 3, kind: input, shape index: {}]
  %s4 = inlined_call_operand.vmem [shape: f32[256,32], index: 4, kind: output, shape index: {}]
  %s5 = sld [smem:[#allocation0]]
  $region53: #{tpu_custom_call.1} parent=0
    _
  %s7 = ssub.s32 1, %s5
  %s8 = scalar_select 0, %s7, %s5
  $region1: #{tpu_custom_call.1} parent=0
    #allocation4 [shape = 'u8[65536]{0}', space=vmem, size = 0x10000, scoped, tag = 'input window, operand 0']
    #allocation5 [shape = 's32[2]{0}', space=sflag, size = 0x8, scoped, tag = 'scoped memory for tpu_custom_call.1']
    %9 = vsyncpa [#allocation5], 0
    %s10 = scalar_lea.sflag [#allocation5], 1
    %11 = vsyncpa %s10, 0
    loop: start=0, step=1, limit=4
    $region2: #{tpu_custom_call.1} parent=1 // loop_pre_header
      _
    $region3: #{tpu_custom_call.1} parent=1 // loop_header
      %s13 = sphi 0, %s17
      %p14 = scmp.ge.s32.totalorder %s13, 4
      %s23 = sphi 0, %s25
      %s26 = sphi 0, %s23
      %s27 = sphi 0, %s26
      %s43 = sphi 0, %s27
      %s47 = sphi 0, %s47
      %s49 = sphi 0, %s47
      %s50 = sphi 0, %s49
      %s64 = sphi 0, %s50
      %s68 = sphi 0, %s68
      %s70 = sphi 0, %s68
      %s71 = sphi 0, %s70
      %s85 = sphi 0, %s71
      %s89 = sphi 0, %s89
      %s91 = sphi 0, %s89
      %s92 = sphi 0, %s91
      %s106 = sphi 0, %s92
      %s112 = sphi 0, %s114
      %s115 = sphi 0, %s112
      %s116 = sphi 0, %s115
      %s132 = sphi 0, %s116
    $region4: #{tpu_custom_call.1} parent=1 // loop_header_branch
      %16 = sbr.rel (%p14) target = $region8
    $region5: #{tpu_custom_call.1} parent=1 // loop_body
      %s18 = ssub.s32 %s13, 1
      %s19 = ssub.s32 %s13, 2
      %s20 = sadd.s32 %s13, 1
      %s21 = ssub.s32 %s13, %s20
      %p22 = scmp.eq.s32.totalorder %s21, 0
      %s24 = sadd.s32 %s23, 1
      %s25 = scalar_select %p22, %s23, %s24
      %p28 = pneg %p22
      %p29 = scmp.eq.s32.totalorder %s13, 1
      %p30 = por %p28, %p29
      %p31 = scmp.ne.s32.totalorder %s23, %s26
      %p32 = scmp.eq.s32.totalorder %s13, 0
      %p33 = por %p31, %p32
      %p34 = scmp.ne.s32.totalorder %s23, %s26
      %p35 = scmp.eq.s32.totalorder %s18, 1
      %p36 = por %p34, %p35
      %p37 = scmp.ne.s32.totalorder %s26, %s27
      %p38 = scmp.eq.s32.totalorder %s18, 0
      %p39 = por %p37, %p38
      %p40 = scmp.ne.s32.totalorder %s26, %s27
      %p41 = scmp.eq.s32.totalorder %s19, 1
      %p42 = por %p40, %p41
      %p44 = scmp.ne.s32.totalorder %s27, %s43
      %p45 = scmp.eq.s32.totalorder %s19, 0
      %p46 = por %p44, %p45
      %s48 = sadd.s32 %s47, 1
      %p51 = scmp.eq.s32.totalorder %s13, 1
      %p52 = scmp.ne.s32.totalorder %s47, %s49
      %p53 = scmp.eq.s32.totalorder %s13, 0
      %p54 = por %p52, %p53
      %p55 = scmp.ne.s32.totalorder %s47, %s49
      %p56 = scmp.eq.s32.totalorder %s18, 1
      %p57 = por %p55, %p56
      %p58 = scmp.ne.s32.totalorder %s49, %s50
      %p59 = scmp.eq.s32.totalorder %s18, 0
      %p60 = por %p58, %p59
      %p61 = scmp.ne.s32.totalorder %s49, %s50
      %p62 = scmp.eq.s32.totalorder %s19, 1
      %p63 = por %p61, %p62
      %p65 = scmp.ne.s32.totalorder %s50, %s64
      %p66 = scmp.eq.s32.totalorder %s19, 0
      %p67 = por %p65, %p66
      %s69 = sadd.s32 %s68, 1
      %p72 = scmp.eq.s32.totalorder %s13, 1
      %p73 = scmp.ne.s32.totalorder %s68, %s70
      %p74 = scmp.eq.s32.totalorder %s13, 0
      %p75 = por %p73, %p74
      %p76 = scmp.ne.s32.totalorder %s68, %s70
      %p77 = scmp.eq.s32.totalorder %s18, 1
      %p78 = por %p76, %p77
      %p79 = scmp.ne.s32.totalorder %s70, %s71
      %p80 = scmp.eq.s32.totalorder %s18, 0
      %p81 = por %p79, %p80
      %p82 = scmp.ne.s32.totalorder %s70, %s71
      %p83 = scmp.eq.s32.totalorder %s19, 1
      %p84 = por %p82, %p83
      %p86 = scmp.ne.s32.totalorder %s71, %s85
      %p87 = scmp.eq.s32.totalorder %s19, 0
      %p88 = por %p86, %p87
      %s90 = sadd.s32 %s89, 1
      %p93 = scmp.eq.s32.totalorder %s13, 1
      %p94 = scmp.ne.s32.totalorder %s89, %s91
      %p95 = scmp.eq.s32.totalorder %s13, 0
      %p96 = por %p94, %p95
      %p97 = scmp.ne.s32.totalorder %s89, %s91
      %p98 = scmp.eq.s32.totalorder %s18, 1
      %p99 = por %p97, %p98
      %p100 = scmp.ne.s32.totalorder %s91, %s92
      %p101 = scmp.eq.s32.totalorder %s18, 0
      %p102 = por %p100, %p101
      %p103 = scmp.ne.s32.totalorder %s91, %s92
      %p104 = scmp.eq.s32.totalorder %s19, 1
      %p105 = por %p103, %p104
      %p107 = scmp.ne.s32.totalorder %s92, %s106
      %p108 = scmp.eq.s32.totalorder %s19, 0
      %p109 = por %p107, %p108
      %s110 = ssub.s32 %s13, %s20
      %p111 = scmp.eq.s32.totalorder %s110, 0
      %s113 = sadd.s32 %s112, 1
      %s114 = scalar_select %p111, %s112, %s113
      %p117 = pneg %p111
      %p118 = scmp.eq.s32.totalorder %s13, 1
      %p119 = por %p117, %p118
      %p120 = scmp.ne.s32.totalorder %s112, %s115
      %p121 = scmp.eq.s32.totalorder %s13, 0
      %p122 = por %p120, %p121
      %p123 = scmp.ne.s32.totalorder %s112, %s115
      %p124 = scmp.eq.s32.totalorder %s18, 1
      %p125 = por %p123, %p124
      %p126 = scmp.ne.s32.totalorder %s115, %s116
      %p127 = scmp.eq.s32.totalorder %s18, 0
      %p128 = por %p126, %p127
      %p129 = scmp.ne.s32.totalorder %s115, %s116
      %p130 = scmp.eq.s32.totalorder %s19, 1
      %p131 = por %p129, %p130
      %p133 = scmp.ne.s32.totalorder %s116, %s132
      %p134 = scmp.eq.s32.totalorder %s19, 0
      %p135 = por %p133, %p134
      %p136 = scmp.le.s32.totalorder 1, %s13
      %p137 = scmp.lt.s32.totalorder %s13, 3
      %p138 = pnand %p136, %p137
      %p139 = pneg %p138
      // Predicated region
      $region9: #{tpu_custom_call.1} parent=5 // pred_check
        _
      $region10: #{tpu_custom_call.1} parent=5 // pred_check_branch
        %141 = sbr.rel (%p138) target = $region12
      $region11: #{tpu_custom_call.1} parent=5 // pred_region
        %s142 = ssub.s32 %s13, 1
        // Predicated region
        $region13: #{tpu_custom_call.1} parent=11 // pred_check
          %p143 = pneg %p60
        $region14: #{tpu_custom_call.1} parent=11 // pred_check_branch
          %145 = sbr.rel (%p143) target = $region16
        $region15: #{tpu_custom_call.1} parent=11 // pred_region
          _
        $region16: #{tpu_custom_call.1} parent=11 // pred_fallthru
          _
        // Predicated region
        $region17: #{tpu_custom_call.1} parent=11 // pred_check
          %p146 = pneg %p81
        $region18: #{tpu_custom_call.1} parent=11 // pred_check_branch
          %148 = sbr.rel (%p146) target = $region20
        $region19: #{tpu_custom_call.1} parent=11 // pred_region
          _
        $region20: #{tpu_custom_call.1} parent=11 // pred_fallthru
          _
        // Predicated region
        $region21: #{tpu_custom_call.1} parent=11 // pred_check
          %p149 = pneg %p102
        $region22: #{tpu_custom_call.1} parent=11 // pred_check_branch
          %151 = sbr.rel (%p149) target = $region24
        $region23: #{tpu_custom_call.1} parent=11 // pred_region
          _
        $region24: #{tpu_custom_call.1} parent=11 // pred_fallthru
          _
      $region12: #{tpu_custom_call.1} parent=5 // pred_fallthru
        _
      %p152 = scmp.lt.s32.totalorder %s13, 2
      // Predicated region
      $region25: #{tpu_custom_call.1} parent=5 // pred_check
        %p153 = pneg %p152
      $region26: #{tpu_custom_call.1} parent=5 // pred_check_branch
        %155 = sbr.rel (%p153) target = $region28
      $region27: #{tpu_custom_call.1} parent=5 // pred_region
        // Predicated region
        $region29: #{tpu_custom_call.1} parent=27 // pred_check
          %p156 = pneg %p33
        $region30: #{tpu_custom_call.1} parent=27 // pred_check_branch
          %158 = sbr.rel (%p156) target = $region32
        $region31: #{tpu_custom_call.1} parent=27 // pred_region
          %s159 = sand.u32 %s23, 1
          %s160 = scalar_lea.sflag [#allocation5], %s159
          %s161 = sand.u32 %s23, 1
          %s162 = smul.addr %s161, 64
          %s163 = scalar_lea.vmem [#allocation4], %s162
          %s164 = smul.u32 4, %s13
          %s166 = ssub.s32 1024, 1024
          %167 = vsyncadd %s160, %s166
          %s168 = smul.addr %s164, 2
          %s169 = smul.addr %s168, 128
          %s170 = scalar_lea.hbm %s0, %s169
          %s171 = sshll.u32 %s163, 4
          %s172 = int_to_ptr.vmem [resolvable:$true] %s171
          %177 = dma.hbm_to_vmem [thread:$0]  %s170, 1024, %s172, %s160, 128, 128, 8
        $region32: #{tpu_custom_call.1} parent=27 // pred_fallthru
          _
      $region28: #{tpu_custom_call.1} parent=5 // pred_fallthru
        _
      %p178 = scmp.le.s32.totalorder 1, %s13
      %p179 = scmp.lt.s32.totalorder %s13, 3
      %p180 = pnand %p178, %p179
      %p181 = pneg %p180
      // Predicated region
      $region33: #{tpu_custom_call.1} parent=5 // pred_check
        _
      $region34: #{tpu_custom_call.1} parent=5 // pred_check_branch
        %183 = sbr.rel (%p180) target = $region36
      $region35: #{tpu_custom_call.1} parent=5 // pred_region
        %s184 = ssub.s32 %s13, 1
        %s185 = sand.u32 %s26, 1
        %s186 = scalar_lea.sflag [#allocation5], %s185
        %s187 = sand.u32 %s26, 1
        %s188 = smul.addr %s187, 64
        %s189 = scalar_lea.vmem [#allocation4], %s188
        // Predicated region
        $region37: #{tpu_custom_call.1} parent=35 // pred_check
          %p190 = pneg %p39
        $region38: #{tpu_custom_call.1} parent=35 // pred_check_branch
          %192 = sbr.rel (%p190) target = $region40
        $region39: #{tpu_custom_call.1} parent=35 // pred_region
          %193 = dma.done %s186, 1024
        $region40: #{tpu_custom_call.1} parent=35 // pred_fallthru
          _
        %s194 = sand.u32 %s26, 1
        %s195 = scalar_lea.sflag [#allocation5], %s194
        %s196 = sand.u32 %s26, 1
        %s197 = smul.addr %s196, 64
        %s198 = scalar_lea.vmem [#allocation4], %s197
        %p199 = pneg %p39
        %p200 = pneg %p36
        %p201 = pneg %p60
        %p202 = pneg %p57
        %p203 = pneg %p81
        %p204 = pneg %p78
        %p205 = pneg %p102
        %p206 = pneg %p99
        %p207 = pneg %p128
        %p208 = pneg %p125
        %s209 = smul.u32 16, %s18
        %p210 = scmp.lt.s32.totalorder %s209, 31
        %s211 = scalar_select %p210, %s209, 31
        %s212 = smul.addr %s211, 8
        %s213 = scalar_lea.vmem %s4, %s212
        %s214 = smul.u32 4, %s18
        %s215 = smul.u32 16, %s18
        %p216 = scmp.lt.s32.totalorder %s215, 31
        %s217 = scalar_select %p216, %s215, 31
        %s218 = smul.addr %s217, 8
        %s219 = scalar_lea.vmem %s4, %s218
        %s220 = smul.u32 16, %s18
        %v221 = vld [vmem:[%s1] sm:$0xff]
        %v222 = vld [vmem:[%s1 + $0x8] sm:$0xff]
        %v223 = vld [vmem:[%s1 + $0x10] sm:$0xff]
        %v224 = vld [vmem:[%s1 + $0x18] sm:$0xff]
        %v225 = vld [vmem:[%s1 + $0x20] sm:$0xff]
        %v226 = vld [vmem:[%s1 + $0x28] sm:$0xff]
        %v227 = vld [vmem:[%s1 + $0x30] sm:$0xff]
        %v228 = vld [vmem:[%s1 + $0x38] sm:$0xff]
        %v229 = vld [vmem:[%s189] sm:$0xff]
        %v230 = vld [vmem:[%s189 + $0x8] sm:$0xff]
        %vm231 = vcmask 130048
        %v233 = vsel %vm231, %v221, 0
        %v236 = vsel %vm231, %v222, 0
        %v239 = vsel %vm231, %v223, 0
        %v242 = vsel %vm231, %v224, 0
        %v245 = vsel %vm231, %v225, 0
        %v248 = vsel %vm231, %v226, 0
        %v251 = vsel %vm231, %v227, 0
        %v254 = vsel %vm231, %v228, 0
        %256 = vmatprep.subr.mxu0 0.0
        %257 = vmatpush1.msra.mxu0 %v229
        %258 = vmatprep.subr.mxu0 0.0
        %259 = vmatpush1.msra.mxu0 %v230
        %260 = vmatprep.subr.mxu0 0.0
        %261 = vmatpush1.msra.mxu0 0.0
        %262 = vmatprep.subr.mxu0 0.0
        %263 = vmatpush1.msra.mxu0 0.0
        %264 = vmatprep.subr.mxu0 0.0
        %265 = vmatpush1.msra.mxu0 0.0
        %266 = vmatprep.subr.mxu0 0.0
        %267 = vmatpush1.msra.mxu0 0.0
        %268 = vmatprep.subr.mxu0 0.0
        %269 = vmatpush1.msra.mxu0 0.0
        %270 = vmatprep.subr.mxu0 0.0
        %271 = vmatpush1.msra.mxu0 0.0
        %272 = vmatprep.subr.mxu0 0.0
        %273 = vmatpush1.msra.mxu0 0.0
        %274 = vmatprep.subr.mxu0 0.0
        %275 = vmatpush1.msra.mxu0 0.0
        %276 = vmatprep.subr.mxu0 0.0
        %277 = vmatpush1.msra.mxu0 0.0
        %278 = vmatprep.subr.mxu0 0.0
        %279 = vmatpush1.msra.mxu0 0.0
        %280 = vmatprep.subr.mxu0 0.0
        %281 = vmatpush1.msra.mxu0 0.0
        %282 = vmatprep.subr.mxu0 0.0
        %283 = vmatpush1.msra.mxu0 0.0
        %284 = vmatprep.subr.mxu0 0.0
        %285 = vmatpush1.msra.mxu0 0.0
        %286 = vmatprep.subr.mxu0 0.0
        %287 = vmatpush1.msra.mxu0 0.0
        %288 = vmatprep.subr.mxu0 0.0
        %289 = vmatpush1.msra.mxu0 0.0
        %290 = vmatprep.subr.mxu0 0.0
        %291 = vmatpush1.msra.mxu0 0.0
        %292 = vmatprep.subr.mxu0 0.0
        %293 = vmatpush1.msra.mxu0 0.0
        %294 = vmatprep.subr.mxu0 0.0
        %295 = vmatpush1.msra.mxu0 0.0
        %296 = vmatprep.subr.mxu0 0.0
        %297 = vmatpush1.msra.mxu0 0.0
        %298 = vmatprep.subr.mxu0 0.0
        %299 = vmatpush1.msra.mxu0 0.0
        %300 = vmatprep.subr.mxu0 0.0
        %301 = vmatpush1.msra.mxu0 0.0
        %302 = vmatprep.subr.mxu0 0.0
        %303 = vmatpush1.msra.mxu0 0.0
        %304 = vmatprep.subr.mxu0 0.0
        %305 = vmatpush1.msra.mxu0 0.0
        %306 = vmatprep.subr.mxu0 0.0
        %307 = vmatpush1.msra.mxu0 0.0
        %308 = vmatprep.subr.mxu0 0.0
        %309 = vmatpush1.msra.mxu0 0.0
        %310 = vmatprep.subr.mxu0 0.0
        %311 = vmatpush1.msra.mxu0 0.0
        %312 = vmatprep.subr.mxu0 0.0
        %313 = vmatpush1.msra.mxu0 0.0
        %314 = vmatprep.subr.mxu0 0.0
        %315 = vmatpush1.msra.mxu0 0.0
        %316 = vmatprep.subr.mxu0 0.0
        %317 = vmatpush1.msra.mxu0 0.0
        %318 = vmatprep.subr.mxu0 0.0
        %319 = vmatpush1.msra.mxu0 0.0
        %320 = vmatprep.mubr.f32.mxu0 0.0
        %321 = vmatmul.mubr.f32.gmra.mrb[0].mxu0 %v233
        %v322 = vpop.f32.mrb[0].mxu0
        %v323 = vadd.f32 0.0, %v322
        %v324 = vpop.f32.mrb[0].mxu0
        %325 = vmatprep.mubr.f32.mxu0 0.0
        %326 = vmatmul.mubr.f32.gmra.mrb[0].mxu0 %v236
        %v327 = vpop.f32.mrb[0].mxu0
        %v328 = vadd.f32 0.0, %v327
        %v329 = vpop.f32.mrb[0].mxu0
        %330 = vmatprep.mubr.f32.mxu0 0.0
        %331 = vmatmul.mubr.f32.gmra.mrb[0].mxu0 %v239
        %v332 = vpop.f32.mrb[0].mxu0
        %v333 = vadd.f32 0.0, %v332
        %v334 = vpop.f32.mrb[0].mxu0
        %335 = vmatprep.mubr.f32.mxu0 0.0
        %336 = vmatmul.mubr.f32.gmra.mrb[0].mxu0 %v242
        %v337 = vpop.f32.mrb[0].mxu0
        %v338 = vadd.f32 0.0, %v337
        %v339 = vpop.f32.mrb[0].mxu0
        %340 = vmatprep.mubr.f32.mxu0 0.0
        %341 = vmatmul.mubr.f32.gmra.mrb[0].mxu0 %v245
        %v342 = vpop.f32.mrb[0].mxu0
        %v343 = vadd.f32 0.0, %v342
        %v344 = vpop.f32.mrb[0].mxu0
        %345 = vmatprep.mubr.f32.mxu0 0.0
        %346 = vmatmul.mubr.f32.gmra.mrb[0].mxu0 %v248
        %v347 = vpop.f32.mrb[0].mxu0
        %v348 = vadd.f32 0.0, %v347
        %v349 = vpop.f32.mrb[0].mxu0
        %350 = vmatprep.mubr.f32.mxu0 0.0
        %351 = vmatmul.mubr.f32.gmra.mrb[0].mxu0 %v251
        %v352 = vpop.f32.mrb[0].mxu0
        %v353 = vadd.f32 0.0, %v352
        %v354 = vpop.f32.mrb[0].mxu0
        %355 = vmatprep.mubr.f32.mxu0 0.0
        %356 = vmatmul.mubr.f32.gmra.mrb[0].mxu0 %v254
        %v357 = vpop.f32.mrb[0].mxu0
        %v358 = vadd.f32 0.0, %v357
        %v359 = vpop.f32.mrb[0].mxu0
        %360 = vdwg.mxu0
        %361 = vst.msk [vmem:[#allocation2] sm:$0xff] %vm231, %v323
        %362 = vst.msk [vmem:[#allocation2 + $0x8] sm:$0xff] %vm231, %v328
        %363 = vst.msk [vmem:[#allocation2 + $0x10] sm:$0xff] %vm231, %v333
        %364 = vst.msk [vmem:[#allocation2 + $0x18] sm:$0xff] %vm231, %v338
        %365 = vst.msk [vmem:[#allocation3] sm:$0xff] %vm231, %v343
        %366 = vst.msk [vmem:[#allocation3 + $0x8] sm:$0xff] %vm231, %v348
        %367 = vst.msk [vmem:[#allocation3 + $0x10] sm:$0xff] %vm231, %v353
        %368 = vst.msk [vmem:[#allocation3 + $0x18] sm:$0xff] %vm231, %v358
        %s369 = scalar_lea.vmem %s189, 16 [#allocation4]
        %v370 = vld [vmem:[%s369] sm:$0xff]
        %v371 = vld [vmem:[%s369 + $0x8] sm:$0xff]
        %372 = vmatprep.subr.mxu0 0.0
        %373 = vmatpush1.msra.mxu0 %v370
        %374 = vmatprep.subr.mxu0 0.0
        %375 = vmatpush1.msra.mxu0 %v371
        %376 = vmatprep.subr.mxu0 0.0
        %377 = vmatpush1.msra.mxu0 0.0
        %378 = vmatprep.subr.mxu0 0.0
        %379 = vmatpush1.msra.mxu0 0.0
        %380 = vmatprep.subr.mxu0 0.0
        %381 = vmatpush1.msra.mxu0 0.0
        %382 = vmatprep.subr.mxu0 0.0
        %383 = vmatpush1.msra.mxu0 0.0
        %384 = vmatprep.subr.mxu0 0.0
        %385 = vmatpush1.msra.mxu0 0.0
        %386 = vmatprep.subr.mxu0 0.0
        %387 = vmatpush1.msra.mxu0 0.0
        %388 = vmatprep.subr.mxu0 0.0
        %389 = vmatpush1.msra.mxu0 0.0
        %390 = vmatprep.subr.mxu0 0.0
        %391 = vmatpush1.msra.mxu0 0.0
        %392 = vmatprep.subr.mxu0 0.0
        %393 = vmatpush1.msra.mxu0 0.0
        %394 = vmatprep.subr.mxu0 0.0
        %395 = vmatpush1.msra.mxu0 0.0
        %396 = vmatprep.subr.mxu0 0.0
        %397 = vmatpush1.msra.mxu0 0.0
        %398 = vmatprep.subr.mxu0 0.0
        %399 = vmatpush1.msra.mxu0 0.0
        %400 = vmatprep.subr.mxu0 0.0
        %401 = vmatpush1.msra.mxu0 0.0
        %402 = vmatprep.subr.mxu0 0.0
        %403 = vmatpush1.msra.mxu0 0.0
        %404 = vmatprep.subr.mxu0 0.0
        %405 = vmatpush1.msra.mxu0 0.0
        %406 = vmatprep.subr.mxu0 0.0
        %407 = vmatpush1.msra.mxu0 0.0
        %408 = vmatprep.subr.mxu0 0.0
        %409 = vmatpush1.msra.mxu0 0.0
        %410 = vmatprep.subr.mxu0 0.0
        %411 = vmatpush1.msra.mxu0 0.0
        %412 = vmatprep.subr.mxu0 0.0
        %413 = vmatpush1.msra.mxu0 0.0
        %414 = vmatprep.subr.mxu0 0.0
        %415 = vmatpush1.msra.mxu0 0.0
        %416 = vmatprep.subr.mxu0 0.0
        %417 = vmatpush1.msra.mxu0 0.0
        %418 = vmatprep.subr.mxu0 0.0
        %419 = vmatpush1.msra.mxu0 0.0
        %420 = vmatprep.subr.mxu0 0.0
        %421 = vmatpush1.msra.mxu0 0.0
        %422 = vmatprep.subr.mxu0 0.0
        %423 = vmatpush1.msra.mxu0 0.0
        %424 = vmatprep.subr.mxu0 0.0
        %425 = vmatpush1.msra.mxu0 0.0
        %426 = vmatprep.subr.mxu0 0.0
        %427 = vmatpush1.msra.mxu0 0.0
        %428 = vmatprep.subr.mxu0 0.0
        %429 = vmatpush1.msra.mxu0 0.0
        %430 = vmatprep.subr.mxu0 0.0
        %431 = vmatpush1.msra.mxu0 0.0
        %432 = vmatprep.subr.mxu0 0.0
        %433 = vmatpush1.msra.mxu0 0.0
        %434 = vmatprep.subr.mxu0 0.0
        %435 = vmatpush1.msra.mxu0 0.0
        %436 = vmatprep.mubr.f32.mxu0 0.0
        %437 = vmatmul.mubr.f32.gmra.mrb[0].mxu0 %v233
        %v438 = vpop.f32.mrb[0].mxu0
        %v439 = vadd.f32 0.0, %v438
        %v440 = vpop.f32.mrb[0].mxu0
        %441 = vmatprep.mubr.f32.mxu0 0.0
        %442 = vmatmul.mubr.f32.gmra.mrb[0].mxu0 %v236
        %v443 = vpop.f32.mrb[0].mxu0
        %v444 = vadd.f32 0.0, %v443
        %v445 = vpop.f32.mrb[0].mxu0
        %446 = vmatprep.mubr.f32.mxu0 0.0
        %447 = vmatmul.mubr.f32.gmra.mrb[0].mxu0 %v239
        %v448 = vpop.f32.mrb[0].mxu0
        %v449 = vadd.f32 0.0, %v448
        %v450 = vpop.f32.mrb[0].mxu0
        %451 = vmatprep.mubr.f32.mxu0 0.0
        %452 = vmatmul.mubr.f32.gmra.mrb[0].mxu0 %v242
        %v453 = vpop.f32.mrb[0].mxu0
        %v454 = vadd.f32 0.0, %v453
        %v455 = vpop.f32.mrb[0].mxu0
        %456 = vmatprep.mubr.f32.mxu0 0.0
        %457 = vmatmul.mubr.f32.gmra.mrb[0].mxu0 %v245
        %v458 = vpop.f32.mrb[0].mxu0
        %v459 = vadd.f32 0.0, %v458
        %v460 = vpop.f32.mrb[0].mxu0
        %461 = vmatprep.mubr.f32.mxu0 0.0
        %462 = vmatmul.mubr.f32.gmra.mrb[0].mxu0 %v248
        %v463 = vpop.f32.mrb[0].mxu0
        %v464 = vadd.f32 0.0, %v463
        %v465 = vpop.f32.mrb[0].mxu0
        %466 = vmatprep.mubr.f32.mxu0 0.0
        %467 = vmatmul.mubr.f32.gmra.mrb[0].mxu0 %v251
        %v468 = vpop.f32.mrb[0].mxu0
        %v469 = vadd.f32 0.0, %v468
        %v470 = vpop.f32.mrb[0].mxu0
        %471 = vmatprep.mubr.f32.mxu0 0.0
        %472 = vmatmul.mubr.f32.gmra.mrb[0].mxu0 %v254
        %v473 = vpop.f32.mrb[0].mxu0
        %v474 = vadd.f32 0.0, %v473
        %v475 = vpop.f32.mrb[0].mxu0
        %476 = vdwg.mxu0
        %477 = vst.msk [vmem:[#allocation2 + $0x20] sm:$0xff] %vm231, %v439
        %478 = vst.msk [vmem:[#allocation2 + $0x28] sm:$0xff] %vm231, %v444
        %479 = vst.msk [vmem:[#allocation2 + $0x30] sm:$0xff] %vm231, %v449
        %480 = vst.msk [vmem:[#allocation2 + $0x38] sm:$0xff] %vm231, %v454
        %481 = vst.msk [vmem:[#allocation3 + $0x20] sm:$0xff] %vm231, %v459
        %482 = vst.msk [vmem:[#allocation3 + $0x28] sm:$0xff] %vm231, %v464
        %483 = vst.msk [vmem:[#allocation3 + $0x30] sm:$0xff] %vm231, %v469
        %484 = vst.msk [vmem:[#allocation3 + $0x38] sm:$0xff] %vm231, %v474
        %s485 = scalar_lea.vmem %s189, 32 [#allocation4]
        %v486 = vld [vmem:[%s485] sm:$0xff]
        %v487 = vld [vmem:[%s485 + $0x8] sm:$0xff]
        %488 = vmatprep.subr.mxu0 0.0
        %489 = vmatpush1.msra.mxu0 %v486
        %490 = vmatprep.subr.mxu0 0.0
        %491 = vmatpush1.msra.mxu0 %v487
        %492 = vmatprep.subr.mxu0 0.0
        %493 = vmatpush1.msra.mxu0 0.0
        %494 = vmatprep.subr.mxu0 0.0
        %495 = vmatpush1.msra.mxu0 0.0
        %496 = vmatprep.subr.mxu0 0.0
        %497 = vmatpush1.msra.mxu0 0.0
        %498 = vmatprep.subr.mxu0 0.0
        %499 = vmatpush1.msra.mxu0 0.0
        %500 = vmatprep.subr.mxu0 0.0
        %501 = vmatpush1.msra.mxu0 0.0
        %502 = vmatprep.subr.mxu0 0.0
        %503 = vmatpush1.msra.mxu0 0.0
        %504 = vmatprep.subr.mxu0 0.0
        %505 = vmatpush1.msra.mxu0 0.0
        %506 = vmatprep.subr.mxu0 0.0
        %507 = vmatpush1.msra.mxu0 0.0
        %508 = vmatprep.subr.mxu0 0.0
        %509 = vmatpush1.msra.mxu0 0.0
        %510 = vmatprep.subr.mxu0 0.0
        %511 = vmatpush1.msra.mxu0 0.0
        %512 = vmatprep.subr.mxu0 0.0
        %513 = vmatpush1.msra.mxu0 0.0
        %514 = vmatprep.subr.mxu0 0.0
        %515 = vmatpush1.msra.mxu0 0.0
        %516 = vmatprep.subr.mxu0 0.0
        %517 = vmatpush1.msra.mxu0 0.0
        %518 = vmatprep.subr.mxu0 0.0
        %519 = vmatpush1.msra.mxu0 0.0
        %520 = vmatprep.subr.mxu0 0.0
        %521 = vmatpush1.msra.mxu0 0.0
        %522 = vmatprep.subr.mxu0 0.0
        %523 = vmatpush1.msra.mxu0 0.0
        %524 = vmatprep.subr.mxu0 0.0
        %525 = vmatpush1.msra.mxu0 0.0
        %526 = vmatprep.subr.mxu0 0.0
        %527 = vmatpush1.msra.mxu0 0.0
        %528 = vmatprep.subr.mxu0 0.0
        %529 = vmatpush1.msra.mxu0 0.0
        %530 = vmatprep.subr.mxu0 0.0
        %531 = vmatpush1.msra.mxu0 0.0
        %532 = vmatprep.subr.mxu0 0.0
        %533 = vmatpush1.msra.mxu0 0.0
        %534 = vmatprep.subr.mxu0 0.0
        %535 = vmatpush1.msra.mxu0 0.0
        %536 = vmatprep.subr.mxu0 0.0
        %537 = vmatpush1.msra.mxu0 0.0
        %538 = vmatprep.subr.mxu0 0.0
        %539 = vmatpush1.msra.mxu0 0.0
        %540 = vmatprep.subr.mxu0 0.0
        %541 = vmatpush1.msra.mxu0 0.0
        %542 = vmatprep.subr.mxu0 0.0
        %543 = vmatpush1.msra.mxu0 0.0
        %544 = vmatprep.subr.mxu0 0.0
        %545 = vmatpush1.msra.mxu0 0.0
        %546 = vmatprep.subr.mxu0 0.0
        %547 = vmatpush1.msra.mxu0 0.0
        %548 = vmatprep.subr.mxu0 0.0
        %549 = vmatpush1.msra.mxu0 0.0
        %550 = vmatprep.subr.mxu0 0.0
        %551 = vmatpush1.msra.mxu0 0.0
        %552 = vmatprep.mubr.f32.mxu0 0.0
        %553 = vmatmul.mubr.f32.gmra.mrb[0].mxu0 %v233
        %v554 = vpop.f32.mrb[0].mxu0
        %v555 = vadd.f32 0.0, %v554
        %v556 = vpop.f32.mrb[0].mxu0
        %557 = vmatprep.mubr.f32.mxu0 0.0
        %558 = vmatmul.mubr.f32.gmra.mrb[0].mxu0 %v236
        %v559 = vpop.f32.mrb[0].mxu0
        %v560 = vadd.f32 0.0, %v559
        %v561 = vpop.f32.mrb[0].mxu0
        %562 = vmatprep.mubr.f32.mxu0 0.0
        %563 = vmatmul.mubr.f32.gmra.mrb[0].mxu0 %v239
        %v564 = vpop.f32.mrb[0].mxu0
        %v565 = vadd.f32 0.0, %v564
        %v566 = vpop.f32.mrb[0].mxu0
        %567 = vmatprep.mubr.f32.mxu0 0.0
        %568 = vmatmul.mubr.f32.gmra.mrb[0].mxu0 %v242
        %v569 = vpop.f32.mrb[0].mxu0
        %v570 = vadd.f32 0.0, %v569
        %v571 = vpop.f32.mrb[0].mxu0
        %572 = vmatprep.mubr.f32.mxu0 0.0
        %573 = vmatmul.mubr.f32.gmra.mrb[0].mxu0 %v245
        %v574 = vpop.f32.mrb[0].mxu0
        %v575 = vadd.f32 0.0, %v574
        %v576 = vpop.f32.mrb[0].mxu0
        %577 = vmatprep.mubr.f32.mxu0 0.0
        %578 = vmatmul.mubr.f32.gmra.mrb[0].mxu0 %v248
        %v579 = vpop.f32.mrb[0].mxu0
        %v580 = vadd.f32 0.0, %v579
        %v581 = vpop.f32.mrb[0].mxu0
        %582 = vmatprep.mubr.f32.mxu0 0.0
        %583 = vmatmul.mubr.f32.gmra.mrb[0].mxu0 %v251
        %v584 = vpop.f32.mrb[0].mxu0
        %v585 = vadd.f32 0.0, %v584
        %v586 = vpop.f32.mrb[0].mxu0
        %587 = vmatprep.mubr.f32.mxu0 0.0
        %588 = vmatmul.mubr.f32.gmra.mrb[0].mxu0 %v254
        %v589 = vpop.f32.mrb[0].mxu0
        %v590 = vadd.f32 0.0, %v589
        %v591 = vpop.f32.mrb[0].mxu0
        %592 = vdwg.mxu0
        %593 = vst.msk [vmem:[#allocation2 + $0x40] sm:$0xff] %vm231, %v555
        %594 = vst.msk [vmem:[#allocation2 + $0x48] sm:$0xff] %vm231, %v560
        %595 = vst.msk [vmem:[#allocation2 + $0x50] sm:$0xff] %vm231, %v565
        %596 = vst.msk [vmem:[#allocation2 + $0x58] sm:$0xff] %vm231, %v570
        %597 = vst.msk [vmem:[#allocation3 + $0x40] sm:$0xff] %vm231, %v575
        %598 = vst.msk [vmem:[#allocation3 + $0x48] sm:$0xff] %vm231, %v580
        %599 = vst.msk [vmem:[#allocation3 + $0x50] sm:$0xff] %vm231, %v585
        %600 = vst.msk [vmem:[#allocation3 + $0x58] sm:$0xff] %vm231, %v590
        %s601 = scalar_lea.vmem %s189, 48 [#allocation4]
        %v602 = vld [vmem:[%s601] sm:$0xff]
        %v603 = vld [vmem:[%s601 + $0x8] sm:$0xff]
        %604 = vmatprep.subr.mxu0 0.0
        %605 = vmatpush1.msra.mxu0 %v602
        %606 = vmatprep.subr.mxu0 0.0
        %607 = vmatpush1.msra.mxu0 %v603
        %608 = vmatprep.subr.mxu0 0.0
        %609 = vmatpush1.msra.mxu0 0.0
        %610 = vmatprep.subr.mxu0 0.0
        %611 = vmatpush1.msra.mxu0 0.0
        %612 = vmatprep.subr.mxu0 0.0
        %613 = vmatpush1.msra.mxu0 0.0
        %614 = vmatprep.subr.mxu0 0.0
        %615 = vmatpush1.msra.mxu0 0.0
        %616 = vmatprep.subr.mxu0 0.0
        %617 = vmatpush1.msra.mxu0 0.0
        %618 = vmatprep.subr.mxu0 0.0
        %619 = vmatpush1.msra.mxu0 0.0
        %620 = vmatprep.subr.mxu0 0.0
        %621 = vmatpush1.msra.mxu0 0.0
        %622 = vmatprep.subr.mxu0 0.0
        %623 = vmatpush1.msra.mxu0 0.0
        %624 = vmatprep.subr.mxu0 0.0
        %625 = vmatpush1.msra.mxu0 0.0
        %626 = vmatprep.subr.mxu0 0.0
        %627 = vmatpush1.msra.mxu0 0.0
        %628 = vmatprep.subr.mxu0 0.0
        %629 = vmatpush1.msra.mxu0 0.0
        %630 = vmatprep.subr.mxu0 0.0
        %631 = vmatpush1.msra.mxu0 0.0
        %632 = vmatprep.subr.mxu0 0.0
        %633 = vmatpush1.msra.mxu0 0.0
        %634 = vmatprep.subr.mxu0 0.0
        %635 = vmatpush1.msra.mxu0 0.0
        %636 = vmatprep.subr.mxu0 0.0
        %637 = vmatpush1.msra.mxu0 0.0
        %638 = vmatprep.subr.mxu0 0.0
        %639 = vmatpush1.msra.mxu0 0.0
        %640 = vmatprep.subr.mxu0 0.0
        %641 = vmatpush1.msra.mxu0 0.0
        %642 = vmatprep.subr.mxu0 0.0
        %643 = vmatpush1.msra.mxu0 0.0
        %644 = vmatprep.subr.mxu0 0.0
        %645 = vmatpush1.msra.mxu0 0.0
        %646 = vmatprep.subr.mxu0 0.0
        %647 = vmatpush1.msra.mxu0 0.0
        %648 = vmatprep.subr.mxu0 0.0
        %649 = vmatpush1.msra.mxu0 0.0
        %650 = vmatprep.subr.mxu0 0.0
        %651 = vmatpush1.msra.mxu0 0.0
        %652 = vmatprep.subr.mxu0 0.0
        %653 = vmatpush1.msra.mxu0 0.0
        %654 = vmatprep.subr.mxu0 0.0
        %655 = vmatpush1.msra.mxu0 0.0
        %656 = vmatprep.subr.mxu0 0.0
        %657 = vmatpush1.msra.mxu0 0.0
        %658 = vmatprep.subr.mxu0 0.0
        %659 = vmatpush1.msra.mxu0 0.0
        %660 = vmatprep.subr.mxu0 0.0
        %661 = vmatpush1.msra.mxu0 0.0
        %662 = vmatprep.subr.mxu0 0.0
        %663 = vmatpush1.msra.mxu0 0.0
        %664 = vmatprep.subr.mxu0 0.0
        %665 = vmatpush1.msra.mxu0 0.0
        %666 = vmatprep.subr.mxu0 0.0
        %667 = vmatpush1.msra.mxu0 0.0
        %668 = vmatprep.mubr.f32.mxu0 0.0
        %669 = vmatmul.mubr.f32.gmra.mrb[0].mxu0 %v233
        %v670 = vpop.f32.mrb[0].mxu0
        %v671 = vadd.f32 0.0, %v670
        %v672 = vpop.f32.mrb[0].mxu0
        %673 = vmatprep.mubr.f32.mxu0 0.0
        %674 = vmatmul.mubr.f32.gmra.mrb[0].mxu0 %v236
        %v675 = vpop.f32.mrb[0].mxu0
        %v676 = vadd.f32 0.0, %v675
        %v677 = vpop.f32.mrb[0].mxu0
        %678 = vmatprep.mubr.f32.mxu0 0.0
        %679 = vmatmul.mubr.f32.gmra.mrb[0].mxu0 %v239
        %v680 = vpop.f32.mrb[0].mxu0
        %v681 = vadd.f32 0.0, %v680
        %v682 = vpop.f32.mrb[0].mxu0
        %683 = vmatprep.mubr.f32.mxu0 0.0
        %684 = vmatmul.mubr.f32.gmra.mrb[0].mxu0 %v242
        %v685 = vpop.f32.mrb[0].mxu0
        %v686 = vadd.f32 0.0, %v685
        %v687 = vpop.f32.mrb[0].mxu0
        %688 = vmatprep.mubr.f32.mxu0 0.0
        %689 = vmatmul.mubr.f32.gmra.mrb[0].mxu0 %v245
        %v690 = vpop.f32.mrb[0].mxu0
        %v691 = vadd.f32 0.0, %v690
        %v692 = vpop.f32.mrb[0].mxu0
        %693 = vmatprep.mubr.f32.mxu0 0.0
        %694 = vmatmul.mubr.f32.gmra.mrb[0].mxu0 %v248
        %v695 = vpop.f32.mrb[0].mxu0
        %v696 = vadd.f32 0.0, %v695
        %v697 = vpop.f32.mrb[0].mxu0
        %698 = vmatprep.mubr.f32.mxu0 0.0
        %699 = vmatmul.mubr.f32.gmra.mrb[0].mxu0 %v251
        %v700 = vpop.f32.mrb[0].mxu0
        %v701 = vadd.f32 0.0, %v700
        %v702 = vpop.f32.mrb[0].mxu0
        %703 = vmatprep.mubr.f32.mxu0 0.0
        %704 = vmatmul.mubr.f32.gmra.mrb[0].mxu0 %v254
        %v705 = vpop.f32.mrb[0].mxu0
        %v706 = vadd.f32 0.0, %v705
        %v707 = vpop.f32.mrb[0].mxu0
        %708 = vdwg.mxu0
        %709 = vst.msk [vmem:[#allocation2 + $0x60] sm:$0xff] %vm231, %v671
        %710 = vst.msk [vmem:[#allocation2 + $0x68] sm:$0xff] %vm231, %v676
        %711 = vst.msk [vmem:[#allocation2 + $0x70] sm:$0xff] %vm231, %v681
        %712 = vst.msk [vmem:[#allocation2 + $0x78] sm:$0xff] %vm231, %v686
        %713 = vst.msk [vmem:[#allocation3 + $0x60] sm:$0xff] %vm231, %v691
        %714 = vst.msk [vmem:[#allocation3 + $0x68] sm:$0xff] %vm231, %v696
        %715 = vst.msk [vmem:[#allocation3 + $0x70] sm:$0xff] %vm231, %v701
        %716 = vst.msk [vmem:[#allocation3 + $0x78] sm:$0xff] %vm231, %v706
        %v717 = vld [vmem:[#allocation2] sm:$0xff]
        %v718 = vld [vmem:[#allocation2 + $0x8] sm:$0xff]
        %v719 = vld [vmem:[#allocation2 + $0x10] sm:$0xff]
        %v720 = vld [vmem:[#allocation2 + $0x18] sm:$0xff]
        %v721 = vld [vmem:[#allocation2 + $0x20] sm:$0xff]
        %v722 = vld [vmem:[#allocation2 + $0x28] sm:$0xff]
        %v723 = vld [vmem:[#allocation2 + $0x30] sm:$0xff]
        %v724 = vld [vmem:[#allocation2 + $0x38] sm:$0xff]
        %v725 = vld [vmem:[#allocation2 + $0x40] sm:$0xff]
        %v726 = vld [vmem:[#allocation2 + $0x48] sm:$0xff]
        %v727 = vld [vmem:[#allocation2 + $0x50] sm:$0xff]
        %v728 = vld [vmem:[#allocation2 + $0x58] sm:$0xff]
        %v729 = vld [vmem:[#allocation2 + $0x60] sm:$0xff]
        %v730 = vld [vmem:[#allocation2 + $0x68] sm:$0xff]
        %v731 = vld [vmem:[#allocation2 + $0x70] sm:$0xff]
        %v732 = vld [vmem:[#allocation2 + $0x78] sm:$0xff]
        %v733 = vld [vmem:[%s2] sm:$0xff]
        %v734 = vld [vmem:[%s2 + $0x8] sm:$0xff]
        %v735 = vld [vmem:[#allocation3] sm:$0xff]
        %v736 = vld [vmem:[#allocation3 + $0x8] sm:$0xff]
        %v737 = vld [vmem:[#allocation3 + $0x10] sm:$0xff]
        %v738 = vld [vmem:[#allocation3 + $0x18] sm:$0xff]
        %v739 = vld [vmem:[#allocation3 + $0x20] sm:$0xff]
        %v740 = vld [vmem:[#allocation3 + $0x28] sm:$0xff]
        %v741 = vld [vmem:[#allocation3 + $0x30] sm:$0xff]
        %v742 = vld [vmem:[#allocation3 + $0x38] sm:$0xff]
        %v743 = vld [vmem:[#allocation3 + $0x40] sm:$0xff]
        %v744 = vld [vmem:[#allocation3 + $0x48] sm:$0xff]
        %v745 = vld [vmem:[#allocation3 + $0x50] sm:$0xff]
        %v746 = vld [vmem:[#allocation3 + $0x58] sm:$0xff]
        %v747 = vld [vmem:[#allocation3 + $0x60] sm:$0xff]
        %v748 = vld [vmem:[#allocation3 + $0x68] sm:$0xff]
        %v749 = vld [vmem:[#allocation3 + $0x70] sm:$0xff]
        %v750 = vld [vmem:[#allocation3 + $0x78] sm:$0xff]
        %v751 = vld [vmem:[%s3] sm:$0xff]
        %v752 = vld [vmem:[%s3 + $0x8] sm:$0xff]
        %v754 = vsel %vm231, %v735, 0
        %v757 = vsel %vm231, %v736, 0
        %v760 = vsel %vm231, %v737, 0
        %v763 = vsel %vm231, %v738, 0
        %v766 = vsel %vm231, %v739, 0
        %v769 = vsel %vm231, %v740, 0
        %v772 = vsel %vm231, %v741, 0
        %v775 = vsel %vm231, %v742, 0
        %v778 = vsel %vm231, %v743, 0
        %v781 = vsel %vm231, %v744, 0
        %v784 = vsel %vm231, %v745, 0
        %v787 = vsel %vm231, %v746, 0
        %v790 = vsel %vm231, %v747, 0
        %v793 = vsel %vm231, %v748, 0
        %v796 = vsel %vm231, %v749, 0
        %v799 = vsel %vm231, %v750, 0
        %801 = vmatprep.subr.mxu0 0.0
        %802 = vmatpush1.msra.mxu0 %v751
        %803 = vmatprep.subr.mxu0 0.0
        %804 = vmatpush1.msra.mxu0 %v752
        %805 = vmatprep.subr.mxu0 0.0
        %806 = vmatpush1.msra.mxu0 0.0
        %807 = vmatprep.subr.mxu0 0.0
        %808 = vmatpush1.msra.mxu0 0.0
        %809 = vmatprep.subr.mxu0 0.0
        %810 = vmatpush1.msra.mxu0 0.0
        %811 = vmatprep.subr.mxu0 0.0
        %812 = vmatpush1.msra.mxu0 0.0
        %813 = vmatprep.subr.mxu0 0.0
        %814 = vmatpush1.msra.mxu0 0.0
        %815 = vmatprep.subr.mxu0 0.0
        %816 = vmatpush1.msra.mxu0 0.0
        %817 = vmatprep.subr.mxu0 0.0
        %818 = vmatpush1.msra.mxu0 0.0
        %819 = vmatprep.subr.mxu0 0.0
        %820 = vmatpush1.msra.mxu0 0.0
        %821 = vmatprep.subr.mxu0 0.0
        %822 = vmatpush1.msra.mxu0 0.0
        %823 = vmatprep.subr.mxu0 0.0
        %824 = vmatpush1.msra.mxu0 0.0
        %825 = vmatprep.subr.mxu0 0.0
        %826 = vmatpush1.msra.mxu0 0.0
        %827 = vmatprep.subr.mxu0 0.0
        %828 = vmatpush1.msra.mxu0 0.0
        %829 = vmatprep.subr.mxu0 0.0
        %830 = vmatpush1.msra.mxu0 0.0
        %831 = vmatprep.subr.mxu0 0.0
        %832 = vmatpush1.msra.mxu0 0.0
        %833 = vmatprep.subr.mxu0 0.0
        %834 = vmatpush1.msra.mxu0 0.0
        %835 = vmatprep.subr.mxu0 0.0
        %836 = vmatpush1.msra.mxu0 0.0
        %837 = vmatprep.subr.mxu0 0.0
        %838 = vmatpush1.msra.mxu0 0.0
        %839 = vmatprep.subr.mxu0 0.0
        %840 = vmatpush1.msra.mxu0 0.0
        %841 = vmatprep.subr.mxu0 0.0
        %842 = vmatpush1.msra.mxu0 0.0
        %843 = vmatprep.subr.mxu0 0.0
        %844 = vmatpush1.msra.mxu0 0.0
        %845 = vmatprep.subr.mxu0 0.0
        %846 = vmatpush1.msra.mxu0 0.0
        %847 = vmatprep.subr.mxu0 0.0
        %848 = vmatpush1.msra.mxu0 0.0
        %849 = vmatprep.subr.mxu0 0.0
        %850 = vmatpush1.msra.mxu0 0.0
        %851 = vmatprep.subr.mxu0 0.0
        %852 = vmatpush1.msra.mxu0 0.0
        %853 = vmatprep.subr.mxu0 0.0
        %854 = vmatpush1.msra.mxu0 0.0
        %855 = vmatprep.subr.mxu0 0.0
        %856 = vmatpush1.msra.mxu0 0.0
        %857 = vmatprep.subr.mxu0 0.0
        %858 = vmatpush1.msra.mxu0 0.0
        %859 = vmatprep.subr.mxu0 0.0
        %860 = vmatpush1.msra.mxu0 0.0
        %861 = vmatprep.subr.mxu0 0.0
        %862 = vmatpush1.msra.mxu0 0.0
        %863 = vmatprep.subr.mxu0 0.0
        %864 = vmatpush1.msra.mxu0 0.0
        %865 = vmatprep.mubr.f32.mxu0 0.0
        %866 = vmatmul.mubr.f32.gmra.mrb[0].mxu0 %v754
        %v867 = vpop.f32.mrb[0].mxu0
        %v868 = vadd.f32 0.0, %v867
        %v869 = vpop.f32.mrb[0].mxu0
        %870 = vmatprep.mubr.f32.mxu0 0.0
        %871 = vmatmul.mubr.f32.gmra.mrb[0].mxu0 %v757
        %v872 = vpop.f32.mrb[0].mxu0
        %v873 = vadd.f32 0.0, %v872
        %v874 = vpop.f32.mrb[0].mxu0
        %875 = vmatprep.mubr.f32.mxu0 0.0
        %876 = vmatmul.mubr.f32.gmra.mrb[0].mxu0 %v760
        %v877 = vpop.f32.mrb[0].mxu0
        %v878 = vadd.f32 0.0, %v877
        %v879 = vpop.f32.mrb[0].mxu0
        %880 = vmatprep.mubr.f32.mxu0 0.0
        %881 = vmatmul.mubr.f32.gmra.mrb[0].mxu0 %v763
        %v882 = vpop.f32.mrb[0].mxu0
        %v883 = vadd.f32 0.0, %v882
        %v884 = vpop.f32.mrb[0].mxu0
        %885 = vmatprep.mubr.f32.mxu0 0.0
        %886 = vmatmul.mubr.f32.gmra.mrb[0].mxu0 %v766
        %v887 = vpop.f32.mrb[0].mxu0
        %v888 = vadd.f32 0.0, %v887
        %v889 = vpop.f32.mrb[0].mxu0
        %890 = vmatprep.mubr.f32.mxu0 0.0
        %891 = vmatmul.mubr.f32.gmra.mrb[0].mxu0 %v769
        %v892 = vpop.f32.mrb[0].mxu0
        %v893 = vadd.f32 0.0, %v892
        %v894 = vpop.f32.mrb[0].mxu0
        %895 = vmatprep.mubr.f32.mxu0 0.0
        %896 = vmatmul.mubr.f32.gmra.mrb[0].mxu0 %v772
        %v897 = vpop.f32.mrb[0].mxu0
        %v898 = vadd.f32 0.0, %v897
        %v899 = vpop.f32.mrb[0].mxu0
        %900 = vmatprep.mubr.f32.mxu0 0.0
        %901 = vmatmul.mubr.f32.gmra.mrb[0].mxu0 %v775
        %v902 = vpop.f32.mrb[0].mxu0
        %v903 = vadd.f32 0.0, %v902
        %v904 = vpop.f32.mrb[0].mxu0
        %905 = vmatprep.mubr.f32.mxu0 0.0
        %906 = vmatmul.mubr.f32.gmra.mrb[0].mxu0 %v778
        %v907 = vpop.f32.mrb[0].mxu0
        %v908 = vadd.f32 0.0, %v907
        %v909 = vpop.f32.mrb[0].mxu0
        %910 = vmatprep.mubr.f32.mxu0 0.0
        %911 = vmatmul.mubr.f32.gmra.mrb[0].mxu0 %v781
        %v912 = vpop.f32.mrb[0].mxu0
        %v913 = vadd.f32 0.0, %v912
        %v914 = vpop.f32.mrb[0].mxu0
        %915 = vmatprep.mubr.f32.mxu0 0.0
        %916 = vmatmul.mubr.f32.gmra.mrb[0].mxu0 %v784
        %v917 = vpop.f32.mrb[0].mxu0
        %v918 = vadd.f32 0.0, %v917
        %v919 = vpop.f32.mrb[0].mxu0
        %920 = vmatprep.mubr.f32.mxu0 0.0
        %921 = vmatmul.mubr.f32.gmra.mrb[0].mxu0 %v787
        %v922 = vpop.f32.mrb[0].mxu0
        %v923 = vadd.f32 0.0, %v922
        %v924 = vpop.f32.mrb[0].mxu0
        %925 = vmatprep.mubr.f32.mxu0 0.0
        %926 = vmatmul.mubr.f32.gmra.mrb[0].mxu0 %v790
        %v927 = vpop.f32.mrb[0].mxu0
        %v928 = vadd.f32 0.0, %v927
        %v929 = vpop.f32.mrb[0].mxu0
        %930 = vmatprep.mubr.f32.mxu0 0.0
        %931 = vmatmul.mubr.f32.gmra.mrb[0].mxu0 %v793
        %v932 = vpop.f32.mrb[0].mxu0
        %v933 = vadd.f32 0.0, %v932
        %v934 = vpop.f32.mrb[0].mxu0
        %935 = vmatprep.mubr.f32.mxu0 0.0
        %936 = vmatmul.mubr.f32.gmra.mrb[0].mxu0 %v796
        %v937 = vpop.f32.mrb[0].mxu0
        %v938 = vadd.f32 0.0, %v937
        %v939 = vpop.f32.mrb[0].mxu0
        %940 = vmatprep.mubr.f32.mxu0 0.0
        %941 = vmatmul.mubr.f32.gmra.mrb[0].mxu0 %v799
        %v942 = vpop.f32.mrb[0].mxu0
        %v943 = vadd.f32 0.0, %v942
        %v944 = vpop.f32.mrb[0].mxu0
        %945 = vdwg.mxu0
        %v947 = vsel %vm231, %v717, 0
        %v950 = vsel %vm231, %v718, 0
        %v953 = vsel %vm231, %v719, 0
        %v956 = vsel %vm231, %v720, 0
        %v959 = vsel %vm231, %v721, 0
        %v962 = vsel %vm231, %v722, 0
        %v965 = vsel %vm231, %v723, 0
        %v968 = vsel %vm231, %v724, 0
        %v971 = vsel %vm231, %v725, 0
        %v974 = vsel %vm231, %v726, 0
        %v977 = vsel %vm231, %v727, 0
        %v980 = vsel %vm231, %v728, 0
        %v983 = vsel %vm231, %v729, 0
        %v986 = vsel %vm231, %v730, 0
        %v989 = vsel %vm231, %v731, 0
        %v992 = vsel %vm231, %v732, 0
        %994 = vmatprep.subr.mxu0 0.0
        %995 = vmatpush1.msra.mxu0 %v733
        %996 = vmatprep.subr.mxu0 0.0
        %997 = vmatpush1.msra.mxu0 %v734
        %998 = vmatprep.subr.mxu0 0.0
        %999 = vmatpush1.msra.mxu0 0.0
        %1000 = vmatprep.subr.mxu0 0.0
        %1001 = vmatpush1.msra.mxu0 0.0
        %1002 = vmatprep.subr.mxu0 0.0
        %1003 = vmatpush1.msra.mxu0 0.0
        %1004 = vmatprep.subr.mxu0 0.0
        %1005 = vmatpush1.msra.mxu0 0.0
        %1006 = vmatprep.subr.mxu0 0.0
        %1007 = vmatpush1.msra.mxu0 0.0
        %1008 = vmatprep.subr.mxu0 0.0
        %1009 = vmatpush1.msra.mxu0 0.0
        %1010 = vmatprep.subr.mxu0 0.0
        %1011 = vmatpush1.msra.mxu0 0.0
        %1012 = vmatprep.subr.mxu0 0.0
        %1013 = vmatpush1.msra.mxu0 0.0
        %1014 = vmatprep.subr.mxu0 0.0
        %1015 = vmatpush1.msra.mxu0 0.0
        %1016 = vmatprep.subr.mxu0 0.0
        %1017 = vmatpush1.msra.mxu0 0.0
        %1018 = vmatprep.subr.mxu0 0.0
        %1019 = vmatpush1.msra.mxu0 0.0
        %1020 = vmatprep.subr.mxu0 0.0
        %1021 = vmatpush1.msra.mxu0 0.0
        %1022 = vmatprep.subr.mxu0 0.0
        %1023 = vmatpush1.msra.mxu0 0.0
        %1024 = vmatprep.subr.mxu0 0.0
        %1025 = vmatpush1.msra.mxu0 0.0
        %1026 = vmatprep.subr.mxu0 0.0
        %1027 = vmatpush1.msra.mxu0 0.0
        %1028 = vmatprep.subr.mxu0 0.0
        %1029 = vmatpush1.msra.mxu0 0.0
        %1030 = vmatprep.subr.mxu0 0.0
        %1031 = vmatpush1.msra.mxu0 0.0
        %1032 = vmatprep.subr.mxu0 0.0
        %1033 = vmatpush1.msra.mxu0 0.0
        %1034 = vmatprep.subr.mxu0 0.0
        %1035 = vmatpush1.msra.mxu0 0.0
        %1036 = vmatprep.subr.mxu0 0.0
        %1037 = vmatpush1.msra.mxu0 0.0
        %1038 = vmatprep.subr.mxu0 0.0
        %1039 = vmatpush1.msra.mxu0 0.0
        %1040 = vmatprep.subr.mxu0 0.0
        %1041 = vmatpush1.msra.mxu0 0.0
        %1042 = vmatprep.subr.mxu0 0.0
        %1043 = vmatpush1.msra.mxu0 0.0
        %1044 = vmatprep.subr.mxu0 0.0
        %1045 = vmatpush1.msra.mxu0 0.0
        %1046 = vmatprep.subr.mxu0 0.0
        %1047 = vmatpush1.msra.mxu0 0.0
        %1048 = vmatprep.subr.mxu0 0.0
        %1049 = vmatpush1.msra.mxu0 0.0
        %1050 = vmatprep.subr.mxu0 0.0
        %1051 = vmatpush1.msra.mxu0 0.0
        %1052 = vmatprep.subr.mxu0 0.0
        %1053 = vmatpush1.msra.mxu0 0.0
        %1054 = vmatprep.subr.mxu0 0.0
        %1055 = vmatpush1.msra.mxu0 0.0
        %1056 = vmatprep.subr.mxu0 0.0
        %1057 = vmatpush1.msra.mxu0 0.0
        %1058 = vmatprep.mubr.f32.mxu0 0.0
        %1059 = vmatmul.mubr.f32.gmra.mrb[0].mxu0 %v947
        %v1060 = vpop.f32.mrb[0].mxu0
        %v1061 = vadd.f32 %v868, %v1060
        %v1062 = vpop.f32.mrb[0].mxu0
        %1063 = vmatprep.mubr.f32.mxu0 0.0
        %1064 = vmatmul.mubr.f32.gmra.mrb[0].mxu0 %v950
        %v1065 = vpop.f32.mrb[0].mxu0
        %v1066 = vadd.f32 %v873, %v1065
        %v1067 = vpop.f32.mrb[0].mxu0
        %1068 = vmatprep.mubr.f32.mxu0 0.0
        %1069 = vmatmul.mubr.f32.gmra.mrb[0].mxu0 %v953
        %v1070 = vpop.f32.mrb[0].mxu0
        %v1071 = vadd.f32 %v878, %v1070
        %v1072 = vpop.f32.mrb[0].mxu0
        %1073 = vmatprep.mubr.f32.mxu0 0.0
        %1074 = vmatmul.mubr.f32.gmra.mrb[0].mxu0 %v956
        %v1075 = vpop.f32.mrb[0].mxu0
        %v1076 = vadd.f32 %v883, %v1075
        %v1077 = vpop.f32.mrb[0].mxu0
        %1078 = vmatprep.mubr.f32.mxu0 0.0
        %1079 = vmatmul.mubr.f32.gmra.mrb[0].mxu0 %v959
        %v1080 = vpop.f32.mrb[0].mxu0
        %v1081 = vadd.f32 %v888, %v1080
        %v1082 = vpop.f32.mrb[0].mxu0
        %1083 = vmatprep.mubr.f32.mxu0 0.0
        %1084 = vmatmul.mubr.f32.gmra.mrb[0].mxu0 %v962
        %v1085 = vpop.f32.mrb[0].mxu0
        %v1086 = vadd.f32 %v893, %v1085
        %v1087 = vpop.f32.mrb[0].mxu0
        %1088 = vmatprep.mubr.f32.mxu0 0.0
        %1089 = vmatmul.mubr.f32.gmra.mrb[0].mxu0 %v965
        %v1090 = vpop.f32.mrb[0].mxu0
        %v1091 = vadd.f32 %v898, %v1090
        %v1092 = vpop.f32.mrb[0].mxu0
        %1093 = vmatprep.mubr.f32.mxu0 0.0
        %1094 = vmatmul.mubr.f32.gmra.mrb[0].mxu0 %v968
        %v1095 = vpop.f32.mrb[0].mxu0
        %v1096 = vadd.f32 %v903, %v1095
        %v1097 = vpop.f32.mrb[0].mxu0
        %1098 = vmatprep.mubr.f32.mxu0 0.0
        %1099 = vmatmul.mubr.f32.gmra.mrb[0].mxu0 %v971
        %v1100 = vpop.f32.mrb[0].mxu0
        %v1101 = vadd.f32 %v908, %v1100
        %v1102 = vpop.f32.mrb[0].mxu0
        %1103 = vmatprep.mubr.f32.mxu0 0.0
        %1104 = vmatmul.mubr.f32.gmra.mrb[0].mxu0 %v974
        %v1105 = vpop.f32.mrb[0].mxu0
        %v1106 = vadd.f32 %v913, %v1105
        %v1107 = vpop.f32.mrb[0].mxu0
        %1108 = vmatprep.mubr.f32.mxu0 0.0
        %1109 = vmatmul.mubr.f32.gmra.mrb[0].mxu0 %v977
        %v1110 = vpop.f32.mrb[0].mxu0
        %v1111 = vadd.f32 %v918, %v1110
        %v1112 = vpop.f32.mrb[0].mxu0
        %1113 = vmatprep.mubr.f32.mxu0 0.0
        %1114 = vmatmul.mubr.f32.gmra.mrb[0].mxu0 %v980
        %v1115 = vpop.f32.mrb[0].mxu0
        %v1116 = vadd.f32 %v923, %v1115
        %v1117 = vpop.f32.mrb[0].mxu0
        %1118 = vmatprep.mubr.f32.mxu0 0.0
        %1119 = vmatmul.mubr.f32.gmra.mrb[0].mxu0 %v983
        %v1120 = vpop.f32.mrb[0].mxu0
        %v1121 = vadd.f32 %v928, %v1120
        %v1122 = vpop.f32.mrb[0].mxu0
        %1123 = vmatprep.mubr.f32.mxu0 0.0
        %1124 = vmatmul.mubr.f32.gmra.mrb[0].mxu0 %v986
        %v1125 = vpop.f32.mrb[0].mxu0
        %v1126 = vadd.f32 %v933, %v1125
        %v1127 = vpop.f32.mrb[0].mxu0
        %1128 = vmatprep.mubr.f32.mxu0 0.0
        %1129 = vmatmul.mubr.f32.gmra.mrb[0].mxu0 %v989
        %v1130 = vpop.f32.mrb[0].mxu0
        %v1131 = vadd.f32 %v938, %v1130
        %v1132 = vpop.f32.mrb[0].mxu0
        %1133 = vmatprep.mubr.f32.mxu0 0.0
        %1134 = vmatmul.mubr.f32.gmra.mrb[0].mxu0 %v992
        %v1135 = vpop.f32.mrb[0].mxu0
        %v1136 = vadd.f32 %v943, %v1135
        %v1137 = vpop.f32.mrb[0].mxu0
        %1138 = vdwg.mxu0
        %vm1139 = vcmask 261120
        %1140 = vst.msk [vmem:[%s219] sm:$0xff] %vm1139, %v1061
        %1141 = vst.msk [vmem:[%s219 + $0x8] sm:$0xff] %vm1139, %v1066
        %1142 = vst.msk [vmem:[%s219 + $0x10] sm:$0xff] %vm1139, %v1071
        %1143 = vst.msk [vmem:[%s219 + $0x18] sm:$0xff] %vm1139, %v1076
        %1144 = vst.msk [vmem:[%s219 + $0x20] sm:$0xff] %vm1139, %v1081
        %1145 = vst.msk [vmem:[%s219 + $0x28] sm:$0xff] %vm1139, %v1086
        %1146 = vst.msk [vmem:[%s219 + $0x30] sm:$0xff] %vm1139, %v1091
        %1147 = vst.msk [vmem:[%s219 + $0x38] sm:$0xff] %vm1139, %v1096
        %1148 = vst.msk [vmem:[%s219 + $0x40] sm:$0xff] %vm1139, %v1101
        %1149 = vst.msk [vmem:[%s219 + $0x48] sm:$0xff] %vm1139, %v1106
        %1150 = vst.msk [vmem:[%s219 + $0x50] sm:$0xff] %vm1139, %v1111
        %1151 = vst.msk [vmem:[%s219 + $0x58] sm:$0xff] %vm1139, %v1116
        %1152 = vst.msk [vmem:[%s219 + $0x60] sm:$0xff] %vm1139, %v1121
        %1153 = vst.msk [vmem:[%s219 + $0x68] sm:$0xff] %vm1139, %v1126
        %1154 = vst.msk [vmem:[%s219 + $0x70] sm:$0xff] %vm1139, %v1131
        %1155 = vst.msk [vmem:[%s219 + $0x78] sm:$0xff] %vm1139, %v1136
        %s1156 = smul.u32 16, %s18
        %p1157 = scmp.lt.s32.totalorder %s1156, 31
        %s1158 = scalar_select %p1157, %s1156, 31
        %s1159 = smul.addr %s1158, 8
        %s1160 = scalar_lea.vmem %s4, %s1159
        // Predicated region
        $region41: #{tpu_custom_call.1} parent=35 // pred_check
          %p1161 = pneg %p125
        $region42: #{tpu_custom_call.1} parent=35 // pred_check_branch
          %1163 = sbr.rel (%p1161) target = $region44
        $region43: #{tpu_custom_call.1} parent=35 // pred_region
          %s1164 = smul.u32 16, %s18
        $region44: #{tpu_custom_call.1} parent=35 // pred_fallthru
          _
      $region36: #{tpu_custom_call.1} parent=5 // pred_fallthru
        _
      %p1165 = scmp.le.s32.totalorder 2, %s13
      // Predicated region
      $region45: #{tpu_custom_call.1} parent=5 // pred_check
        %p1166 = pneg %p1165
      $region46: #{tpu_custom_call.1} parent=5 // pred_check_branch
        %1168 = sbr.rel (%p1166) target = $region48
      $region47: #{tpu_custom_call.1} parent=5 // pred_region
        %s1169 = ssub.s32 %s13, 2
        // Predicated region
        $region49: #{tpu_custom_call.1} parent=47 // pred_check
          %p1170 = pneg %p131
        $region50: #{tpu_custom_call.1} parent=47 // pred_check_branch
          %1172 = sbr.rel (%p1170) target = $region52
        $region51: #{tpu_custom_call.1} parent=47 // pred_region
          %s1173 = smul.u32 16, %s19
          %p1174 = scmp.lt.s32.totalorder %s1173, 31
          %s1175 = scalar_select %p1174, %s1173, 31
          %s1176 = smul.addr %s1175, 8
          %s1177 = scalar_lea.vmem %s4, %s1176
        $region52: #{tpu_custom_call.1} parent=47 // pred_fallthru
          _
      $region48: #{tpu_custom_call.1} parent=5 // pred_fallthru
        _
    $region6: #{tpu_custom_call.1} parent=1 // loop_footer
      %s17 = sadd.s32 1, %s13
    $region7: #{tpu_custom_call.1} parent=1 // loop_footer_branch
      %12 = sbr.rel target = $region3
    $region8: #{tpu_custom_call.1} parent=1 // loop_exit
      _
    %1178 = vsyncpa [#allocation5], 1
    %s1179 = scalar_lea.sflag [#allocation5], 1
    %1180 = vsyncpa %s1179, 1

</llo_original>
